<compile_context>
chip_gen: v7x
topology: tpu7x:2x2x1
jax: 0.10.0
libtpu: 0.0.40
codegen_flags: <defaults>
</compile_context>

<pallas_src>
import functools

import jax
import jax.numpy as jnp
from jax.experimental import pallas as pl
from jax.experimental.pallas import tpu as pltpu

_MIB = 1024 * 1024


def _round_up(x, m):
    return (x + m - 1) // m * m


# ---------------------------------------------------------------------------
# Hardware introspection (generation-aware tiling decisions)
# ---------------------------------------------------------------------------
def _tpu_generation_and_cores():
    """Return ('v5e'|'v6e'|'v7x'|'unknown', tensorcores per chip)."""
    try:
        kind = jax.devices()[0].device_kind.lower()
    except Exception:
        return "unknown", 1
    if "v7" in kind:
        return "v7x", 2
    if "v6" in kind:
        return "v6e", 1
    if "v5p" in kind:            # megacore part, large VMEM
        return "v6e", 2
    if "v5" in kind:
        return "v5e", 1
    return "unknown", 1


_PIPELINE_MODE_OK = None


def _pipeline_mode_supported():
    """Probe (once) whether pl.Buffered(1) is accepted so grid-invariant
    weight inputs can be single-buffered (halves their VMEM footprint)."""
    global _PIPELINE_MODE_OK
    if _PIPELINE_MODE_OK is None:
        try:
            def _copy(x_ref, o_ref):
                o_ref[...] = x_ref[...]
            probe = pl.pallas_call(
                _copy,
                out_shape=jax.ShapeDtypeStruct((16, 128), jnp.float32),
                grid=(2,),
                in_specs=[pl.BlockSpec((8, 128), lambda i: (0, 0),
                                       pipeline_mode=pl.Buffered(1))],
                out_specs=pl.BlockSpec((8, 128), lambda i: (i, 0)),
            )
            jax.jit(probe).lower(jnp.zeros((8, 128), jnp.float32)).compile()
            _PIPELINE_MODE_OK = True
        except Exception:
            _PIPELINE_MODE_OK = False
    return _PIPELINE_MODE_OK


def _spec(shape, index_map, single_buffer):
    if single_buffer:
        return pl.BlockSpec(shape, index_map, pipeline_mode=pl.Buffered(1))
    return pl.BlockSpec(shape, index_map)


# ---------------------------------------------------------------------------
# Kernels
# ---------------------------------------------------------------------------
def _mlp_kernel(x_ref, w1_ref, b1_ref, w2_ref, b2_ref, o_ref, *, bf16_epilogue):
    # First linear (BN already folded into W1/b1): bf16 x bf16 -> f32 on MXU.
    h = jnp.dot(x_ref[...], w1_ref[...], preferred_element_type=jnp.float32)
    h = h + b1_ref[...]
    # ReLU epilogue; on bf16-VALU parts (v6e/v7x) do the max in packed bf16.
    if bf16_epilogue:
        h = h.astype(jnp.bfloat16)
    h = jnp.maximum(h, 0)
    if not bf16_epilogue:
        h = h.astype(jnp.bfloat16)
    # Second linear.
    out = jnp.dot(h, w2_ref[...], preferred_element_type=jnp.float32)
    o_ref[...] = out + b2_ref[...]


def _mlp_kernel_htiled(x_ref, w1_ref, b1_ref, w2_ref, b2_ref, o_ref, acc_ref, *,
                       bf16_epilogue):
    """Same math with the hidden dim blocked on grid axis 1 (reduction axis);
    output accumulated in an f32 VMEM scratch (init at h==0, store at last)."""
    h_idx = pl.program_id(1)

    @pl.when(h_idx == 0)
    def _():
        acc_ref[...] = jnp.zeros_like(acc_ref)

    h = jnp.dot(x_ref[...], w1_ref[...], preferred_element_type=jnp.float32)
    h = h + b1_ref[...]
    if bf16_epilogue:
        h = h.astype(jnp.bfloat16)
    h = jnp.maximum(h, 0)
    if not bf16_epilogue:
        h = h.astype(jnp.bfloat16)
    acc_ref[...] += jnp.dot(h, w2_ref[...], preferred_element_type=jnp.float32)

    @pl.when(h_idx == pl.num_programs(1) - 1)
    def _():
        o_ref[...] = acc_ref[...] + b2_ref[...]


# ---------------------------------------------------------------------------
# Tiling / VMEM configuration
# ---------------------------------------------------------------------------
def _choose_config(M, Kp, Hp, Np, gen, num_tc, single_buf, force_hidden_tiling):
    # VMEM budgets (physical: 128 MiB on v5e/v6e, 64 MiB on v7x).
    if gen in ("v5e", "v6e"):
        budget, limit_cap = 80 * _MIB, 96 * _MIB
    else:                                    # v7x or unknown: stay conservative
        budget, limit_cap = 40 * _MIB, 48 * _MIB

    wfactor = 1 if single_buf else 2
    weights_bytes = wfactor * (Kp * Hp * 2 + Hp * Np * 2 + Hp * 4 + Np * 4)

    def fp_resident(tm_):
        return (weights_bytes
                + 2 * (tm_ * Kp * 2 + tm_ * Np * 4)   # streamed x/out (dbl-buf)
                + tm_ * Hp * 4)                       # f32 hidden intermediate

    Mp8 = _round_up(max(M, 1), 8)
    cap = 512                                         # row-tile cap

    if fp_resident(8) <= budget and not force_hidden_tiling:
        # ------- Path A: weights fully resident, tile only the batch --------
        tm = min(Mp8, cap)
        while tm > 8 and fp_resident(tm) > budget:
            tm -= 8
        if num_tc >= 2 and Mp8 > 8:
            # Multi-TC (v7x): prefer an EVEN grid-step count so both cores
            # get equal work (odd counts leave one core idle a whole tile).
            s = 2
            while s <= max(2, Mp8 // 8):
                cand = max(8, _round_up(-(-Mp8 // s), 8))
                steps = -(-Mp8 // cand)
                if cand <= cap and fp_resident(cand) <= budget and steps % 2 == 0:
                    tm = cand
                    break
                s += 2
        Mp = _round_up(Mp8, tm)
        vmem = min(limit_cap, max(8 * _MIB, int(fp_resident(tm) * 1.25) + 2 * _MIB))
        return dict(mode="resident", tm=tm, th=None, Mp=Mp, vmem_limit=vmem)

    # ------- Path B: weights too big to keep resident -> tile hidden dim -----
    tm = min(Mp8, 256)

    def fp_htiled(tm_, th_):
        return (2 * (tm_ * Kp * 2)                    # x tile
                + 2 * (Kp * th_ * 2 + th_ * 4)        # W1 / b1 column blocks
                + 2 * (th_ * Np * 2)                  # W2 row block
                + 2 * (Np * 4)                        # b2
                + 2 * (tm_ * Np * 4)                  # output tile
                + tm_ * Np * 4                        # f32 accumulator scratch
                + tm_ * th_ * 4)                      # f32 hidden intermediate

    if force_hidden_tiling:
        th = min(128, Hp)
    else:
        th = 128
        d = Hp // 128
        while d >= 1:
            cand = 128 * d
            if Hp % cand == 0 and fp_htiled(tm, cand) <= budget:
                th = cand
                break
            d -= 1
    while tm > 8 and fp_htiled(tm, th) > budget:
        tm -= 8
    Mp = _round_up(Mp8, tm)
    vmem = min(limit_cap, max(8 * _MIB, int(fp_htiled(tm, th) * 1.25) + 2 * _MIB))
    return dict(mode="htiled", tm=tm, th=th, Mp=Mp, vmem_limit=vmem)


# ---------------------------------------------------------------------------
# One-time parameter preparation (BN fold + padding + bf16 cast)
# ---------------------------------------------------------------------------
def prepare_params(params):
    """Fold inference-mode BatchNorm into the first linear, pad feature dims to
    lane-dense multiples of 128, cast weights to bf16.  Call ONCE, reuse."""
    w1, b1 = params["w1"], params["b1"]
    gamma, beta, mean, var = params["bn"]
    w2, b2 = params["w2"], params["b2"]

    dim, hidden = w1.shape
    proj = w2.shape[1]

    scale = gamma / jnp.sqrt(var + 1e-5)
    w1f = w1 * scale[None, :]
    b1f = (b1 - mean) * scale + beta

    Kp = _round_up(dim, 128)
    Hp = _round_up(hidden, 128)
    Np = _round_up(proj, 128)

    def pad2(a, rows, cols):
        pr, pc = rows - a.shape[0], cols - a.shape[1]
        if pr == 0 and pc == 0:
            return a
        return jax.lax.pad(a, jnp.array(0, a.dtype), ((0, pr, 0), (0, pc, 0)))

    arrays = {
        "w1": pad2(w1f.astype(jnp.bfloat16), Kp, Hp),        # BN-folded
        "b1": pad2(b1f.astype(jnp.float32)[None, :], 1, Hp),  # BN-folded
        "w2": pad2(w2.astype(jnp.bfloat16), Hp, Np),
        "b2": pad2(b2.astype(jnp.float32)[None, :], 1, Np),
    }
    return arrays, (dim, hidden, proj)


# ---------------------------------------------------------------------------
# Forward pass
# ---------------------------------------------------------------------------
def mlp_forward(x, arrays, dims, *, force_hidden_tiling=False):
    dim, hidden, proj = dims
    w1_p, b1_p, w2_p, b2_p = arrays["w1"], arrays["b1"], arrays["w2"], arrays["b2"]
    Kp, Hp = w1_p.shape
    Np = w2_p.shape[1]
    M = x.shape[0]

    gen, num_tc = _tpu_generation_and_cores()
    bf16_epilogue = gen in ("v6e", "v7x")       # v5e has no bf16 VALU
    single_buf = _pipeline_mode_supported()

    cfg = _choose_config(M, Kp, Hp, Np, gen, num_tc, single_buf,
                         force_hidden_tiling)
    tm, th, Mp, vmem_limit = cfg["tm"], cfg["th"], cfg["Mp"], cfg["vmem_limit"]

    # x: cast + one lax.pad (no zeros+scatter); skipped entirely when aligned.
    xb = x.astype(jnp.bfloat16)
    if Mp != M or Kp != dim:
        xb = jax.lax.pad(xb, jnp.array(0, jnp.bfloat16),
                         ((0, Mp - M, 0), (0, Kp - dim, 0)))

    cost = pl.CostEstimate(
        flops=2 * Mp * (Kp * Hp + Hp * Np),
        transcendentals=0,
        bytes_accessed=int(Mp * Kp * 2 + Kp * Hp * 2 + Hp * Np * 2
                           + Hp * 4 + Np * 4 + Mp * Np * 4),
    )

    if cfg["mode"] == "resident":
        out = pl.pallas_call(
            functools.partial(_mlp_kernel, bf16_epilogue=bf16_epilogue),
            out_shape=jax.ShapeDtypeStruct((Mp, Np), jnp.float32),
            grid=(Mp // tm,),
            in_specs=[
                pl.BlockSpec((tm, Kp), lambda i: (i, 0)),        # x tile
                _spec((Kp, Hp), lambda i: (0, 0), single_buf),   # W1 (BN-folded)
                _spec((1, Hp), lambda i: (0, 0), single_buf),    # b1 (BN-folded)
                _spec((Hp, Np), lambda i: (0, 0), single_buf),   # W2
                _spec((1, Np), lambda i: (0, 0), single_buf),    # b2
            ],
            out_specs=pl.BlockSpec((tm, Np), lambda i: (i, 0)),
            compiler_params=pltpu.CompilerParams(
                dimension_semantics=("parallel",),
                vmem_limit_bytes=vmem_limit),
            cost_estimate=cost,
        )(xb, w1_p, b1_p, w2_p, b2_p)
    else:
        out = pl.pallas_call(
            functools.partial(_mlp_kernel_htiled, bf16_epilogue=bf16_epilogue),
            out_shape=jax.ShapeDtypeStruct((Mp, Np), jnp.float32),
            grid=(Mp // tm, Hp // th),
            in_specs=[
                pl.BlockSpec((tm, Kp), lambda i, h: (i, 0)),     # x tile
                pl.BlockSpec((Kp, th), lambda i, h: (0, h)),     # W1 column block
                pl.BlockSpec((1, th), lambda i, h: (0, h)),      # b1 block
                pl.BlockSpec((th, Np), lambda i, h: (h, 0)),     # W2 row block
                _spec((1, Np), lambda i, h: (0, 0), single_buf),  # b2
            ],
            out_specs=pl.BlockSpec((tm, Np), lambda i, h: (i, 0)),
            scratch_shapes=[pltpu.VMEM((tm, Np), jnp.float32)],
            compiler_params=pltpu.CompilerParams(
                dimension_semantics=("parallel", "arbitrary"),
                vmem_limit_bytes=vmem_limit),
            cost_estimate=cost,
        )(xb, w1_p, b1_p, w2_p, b2_p)

    if Mp != M or Np != proj:
        out = out[:M, :proj]
    return out


# ---------------------------------------------------------------------------
# Synthetic parameters (deterministic) + plain-JAX reference
# ---------------------------------------------------------------------------
def make_params(key, dim, projection_size, hidden_size=4096):
    k = jax.random.split(key, 8)
    w1 = jax.random.normal(k[0], (dim, hidden_size), jnp.float32) * (1.0 / dim) ** 0.5
    b1 = 0.01 * jax.random.normal(k[1], (hidden_size,), jnp.float32)
    gamma = 1.0 + 0.05 * jax.random.normal(k[2], (hidden_size,), jnp.float32)
    beta = 0.05 * jax.random.normal(k[3], (hidden_size,), jnp.float32)
    mean = 0.05 * jax.random.normal(k[4], (hidden_size,), jnp.float32)
    var = jnp.abs(1.0 + 0.05 * jax.random.normal(k[5], (hidden_size,), jnp.float32))
    w2 = jax.random.normal(k[6], (hidden_size, projection_size), jnp.float32) * (1.0 / hidden_size) ** 0.5
    b2 = 0.01 * jax.random.normal(k[7], (projection_size,), jnp.float32)
    return {"w1": w1, "b1": b1, "bn": (gamma, beta, mean, var), "w2": w2, "b2": b2}


def mlp_reference(x, params):
    gamma, beta, mean, var = params["bn"]
    h = x @ params["w1"] + params["b1"]
    h = gamma * (h - mean) / jnp.sqrt(var + 1e-5) + beta
    h = jnp.maximum(h, 0.0)
    return h @ params["w2"] + params["b2"]


# ---------------------------------------------------------------------------
if __name__ == "__main__":
    # Small shapes consistent with MLP(dim, projection_size, hidden_size).
    batch, dim, hidden, proj = 8, 256, 512, 64
    key = jax.random.PRNGKey(0)
    k_params, k_x = jax.random.split(key)
    params = make_params(k_params, dim, proj, hidden_size=hidden)
    x = jax.random.normal(k_x, (batch, dim), jnp.float32)

    _pipeline_mode_supported()                 # probe once, outside jit
    arrays, dims = prepare_params(params)      # one-time BN fold + padding
    ref = mlp_reference(x, params)

    # Main path (weights resident in VMEM).
    fwd = jax.jit(lambda xx, aa: mlp_forward(xx, aa, dims))
    out = fwd(x, arrays)
    jax.block_until_ready(out)
    assert out.shape == (batch, proj) and out.dtype == jnp.float32
    rel_err = jnp.max(jnp.abs(out - ref)) / (jnp.max(jnp.abs(ref)) + 1e-6)
    assert bool(rel_err < 5e-2), f"resident path: max relative error {rel_err}"

    # Also exercise the hidden-dim reduction path (used automatically when the
    # weights are too large to stay resident in VMEM, e.g. big MLPs on v7x).
    fwd_ht = jax.jit(lambda xx, aa: mlp_forward(xx, aa, dims,
                                                force_hidden_tiling=True))
    out_ht = fwd_ht(x, arrays)
    jax.block_until_ready(out_ht)
    rel_err_ht = jnp.max(jnp.abs(out_ht - ref)) / (jnp.max(jnp.abs(ref)) + 1e-6)
    assert bool(rel_err_ht < 5e-2), f"hidden-tiled path: max relative error {rel_err_ht}"

    print("KERNEL_OK")
</pallas_src>

<mosaic_0001>
module attributes {stable_mosaic.version = 11 : i64} {
  func.func @_mlp_kernel(%arg0: i32, %arg1: memref<8x256xbf16, #tpu.memory_space<vmem>>, %arg2: memref<256x512xbf16, #tpu.memory_space<vmem>>, %arg3: memref<1x512xf32, #tpu.memory_space<vmem>>, %arg4: memref<512x128xbf16, #tpu.memory_space<vmem>>, %arg5: memref<1x128xf32, #tpu.memory_space<vmem>>, %arg6: memref<8x128xf32, #tpu.memory_space<vmem>>) attributes {dimension_semantics = [#tpu.dimension_semantics<parallel>], iteration_bounds = array<i64: 1>, scalar_prefetch = 0 : i64, scratch_operands = 0 : i64, tpu.core_type = #tpu.core_type<tc>, window_params = [{transform_indices = @transform_0, window_bounds = array<i64: 8, 256>}, {pipeline_mode = #tpu.pipeline_mode<synchronous>, transform_indices = @transform_1, window_bounds = array<i64: 256, 512>}, {pipeline_mode = #tpu.pipeline_mode<synchronous>, transform_indices = @transform_2, window_bounds = array<i64: 1, 512>}, {pipeline_mode = #tpu.pipeline_mode<synchronous>, transform_indices = @transform_3, window_bounds = array<i64: 512, 128>}, {pipeline_mode = #tpu.pipeline_mode<synchronous>, transform_indices = @transform_4, window_bounds = array<i64: 1, 128>}, {transform_indices = @transform_5, window_bounds = array<i64: 8, 128>}]} {
    %c0 = arith.constant 0 : index
    %c0_0 = arith.constant 0 : index
    %0 = vector.load %arg1[%c0, %c0_0] : memref<8x256xbf16, #tpu.memory_space<vmem>>, vector<8x256xbf16>
    %c0_1 = arith.constant 0 : index
    %c0_2 = arith.constant 0 : index
    %1 = vector.load %arg2[%c0_1, %c0_2] : memref<256x512xbf16, #tpu.memory_space<vmem>>, vector<256x512xbf16>
    %cst = arith.constant dense<0.000000e+00> : vector<8x512xf32>
    %2 = tpu.matmul %0, %1, %cst {dimension_numbers = #tpu.dot_dimension_numbers<[1], [0], [0], [1], [0, 0, 1, 1], [], []>} : vector<8x256xbf16>, vector<256x512xbf16>, vector<8x512xf32> -> vector<8x512xf32>
    %c0_3 = arith.constant 0 : index
    %c0_4 = arith.constant 0 : index
    %3 = vector.load %arg3[%c0_3, %c0_4] : memref<1x512xf32, #tpu.memory_space<vmem>>, vector<1x512xf32>
    %4 = vector.broadcast %3 : vector<1x512xf32> to vector<8x512xf32>
    %5 = arith.addf %2, %4 : vector<8x512xf32>
    %cst_5 = arith.constant 0.000000e+00 : f32
    %6 = vector.broadcast %cst_5 : f32 to vector<8x512xf32>
    %7 = arith.maximumf %5, %6 : vector<8x512xf32>
    %8 = arith.truncf %7 : vector<8x512xf32> to vector<8x512xbf16>
    %c0_6 = arith.constant 0 : index
    %c0_7 = arith.constant 0 : index
    %9 = vector.load %arg4[%c0_6, %c0_7] : memref<512x128xbf16, #tpu.memory_space<vmem>>, vector<512x128xbf16>
    %cst_8 = arith.constant dense<0.000000e+00> : vector<8x128xf32>
    %10 = tpu.matmul %8, %9, %cst_8 {dimension_numbers = #tpu.dot_dimension_numbers<[1], [0], [0], [1], [0, 0, 1, 1], [], []>} : vector<8x512xbf16>, vector<512x128xbf16>, vector<8x128xf32> -> vector<8x128xf32>
    %c0_9 = arith.constant 0 : index
    %c0_10 = arith.constant 0 : index
    %11 = vector.load %arg5[%c0_9, %c0_10] : memref<1x128xf32, #tpu.memory_space<vmem>>, vector<1x128xf32>
    %12 = vector.broadcast %11 : vector<1x128xf32> to vector<8x128xf32>
    %13 = arith.addf %10, %12 : vector<8x128xf32>
    %c0_11 = arith.constant 0 : index
    %c0_12 = arith.constant 0 : index
    %14 = vector.load %arg6[%c0_11, %c0_12] : memref<8x128xf32, #tpu.memory_space<vmem>>, vector<8x128xf32>
    tpu.vector_store %arg6[%c0_11, %c0_12], %13 {strides = array<i32>} : memref<8x128xf32, #tpu.memory_space<vmem>>, vector<8x128xf32>,
    return
  }
  func.func @transform_0(%arg0: i32) -> (i32, i32) {
    %c0_i32 = arith.constant 0 : i32
    %c0_i32_0 = arith.constant 0 : i32
    return %arg0, %c0_i32 : i32, i32
  }
  func.func @transform_1(%arg0: i32) -> (i32, i32) {
    %c0_i32 = arith.constant 0 : i32
    %c0_i32_0 = arith.constant 0 : i32
    %c0_i32_1 = arith.constant 0 : i32
    return %c0_i32, %c0_i32_0 : i32, i32
  }
  func.func @transform_2(%arg0: i32) -> (i32, i32) {
    %c0_i32 = arith.constant 0 : i32
    %c0_i32_0 = arith.constant 0 : i32
    %c0_i32_1 = arith.constant 0 : i32
    return %c0_i32, %c0_i32_0 : i32, i32
  }
  func.func @transform_3(%arg0: i32) -> (i32, i32) {
    %c0_i32 = arith.constant 0 : i32
    %c0_i32_0 = arith.constant 0 : i32
    %c0_i32_1 = arith.constant 0 : i32
    return %c0_i32, %c0_i32_0 : i32, i32
  }
  func.func @transform_4(%arg0: i32) -> (i32, i32) {
    %c0_i32 = arith.constant 0 : i32
    %c0_i32_0 = arith.constant 0 : i32
    %c0_i32_1 = arith.constant 0 : i32
    return %c0_i32, %c0_i32_0 : i32, i32
  }
  func.func @transform_5(%arg0: i32) -> (i32, i32) {
    %c0_i32 = arith.constant 0 : i32
    %c0_i32_0 = arith.constant 0 : i32
    return %arg0, %c0_i32 : i32, i32
  }
}

</mosaic_0001>

<llo_original>
// kernel: _lambda_.1
$region0: #{_lambda_.1}
  #allocation0 [shape = 'u32[]', space=smem, size = 0x4, offset = 0x4, fixed_abs, tag = 'smem constant byte address 0x4 - core index']
  #allocation1 [shape = 'u32[144,128]{1,0:T(1,128)}', space=vmem, size = 0x12000, scoped, tag = 'internal scratch']
  %s0 = inlined_call_operand.vmem [shape: bf16[8,256], index: 0, kind: input, shape index: {}]
  %s1 = inlined_call_operand.hbm [shape: bf16[256,512], index: 1, kind: input, shape index: {}]
  %s2 = inlined_call_operand.vmem [shape: f32[1,512], index: 2, kind: input, shape index: {}]
  %s3 = inlined_call_operand.hbm [shape: bf16[512,128], index: 3, kind: input, shape index: {}]
  %s4 = inlined_call_operand.vmem [shape: f32[1,128], index: 4, kind: input, shape index: {}]
  %s5 = inlined_call_operand.hbm [shape: f32[8,128], index: 5, kind: output, shape index: {}]
  %s6 = sld [smem:[#allocation0]]
  $region38: #{_lambda_.1} parent=0
    _
  %s8 = ssub.s32 1, %s6
  %s9 = scalar_select 0, %s8, %s6
  $region1: #{_lambda_.1} parent=0
    #allocation2 [shape = 'u8[262144]{0}', space=vmem, size = 0x40000, scoped, tag = 'input window, operand 1, single buffered']
    #allocation3 [shape = 's32[1]{0}', space=sflag, size = 0x4, scoped, tag = 'scoped memory for _lambda_.1']
    #allocation4 [shape = 's32[1]{0}', space=sflag, size = 0x4, scoped, tag = 'scoped memory for _lambda_.1']
    #allocation5 [shape = 'u8[131072]{0}', space=vmem, size = 0x20000, scoped, tag = 'input window, operand 3, single buffered']
    #allocation6 [shape = 's32[1]{0}', space=sflag, size = 0x4, scoped, tag = 'scoped memory for _lambda_.1']
    #allocation7 [shape = 'u8[4096]{0}', space=vmem, size = 0x1000, scoped, tag = 'output window, operand 0, single buffered']
    %10 = vsyncpa [#allocation3], 0
    %11 = vsyncpa [#allocation6], 0
    %12 = vsyncpa [#allocation4], 0
    // Predicated region
    $region2: #{_lambda_.1} parent=1 // pred_check
      _
    $region3: #{_lambda_.1} parent=1 // pred_check_branch
      %14 = sbr.rel (0) target = $region5
    $region4: #{_lambda_.1} parent=1 // pred_region
      _
    $region5: #{_lambda_.1} parent=1 // pred_fallthru
      _
    // Predicated region
    $region6: #{_lambda_.1} parent=1 // pred_check
      _
    $region7: #{_lambda_.1} parent=1 // pred_check_branch
      %16 = sbr.rel (0) target = $region9
    $region8: #{_lambda_.1} parent=1 // pred_region
      %s18 = ssub.s32 8192, 8192
      %19 = vsyncadd [#allocation3], %s18
      %s20 = sshll.u32 [#allocation2], 4
      %s21 = int_to_ptr.vmem [resolvable:$true] %s20
      %26 = dma.hbm_to_vmem [thread:$0]  %s1, 8192, %s21, [#allocation3], 256, 256, 16
    $region9: #{_lambda_.1} parent=1 // pred_fallthru
      _
    // Predicated region
    $region10: #{_lambda_.1} parent=1 // pred_check
      _
    $region11: #{_lambda_.1} parent=1 // pred_check_branch
      %28 = sbr.rel (0) target = $region13
    $region12: #{_lambda_.1} parent=1 // pred_region
      _
    $region13: #{_lambda_.1} parent=1 // pred_fallthru
      _
    // Predicated region
    $region14: #{_lambda_.1} parent=1 // pred_check
      _
    $region15: #{_lambda_.1} parent=1 // pred_check_branch
      %30 = sbr.rel (0) target = $region17
    $region16: #{_lambda_.1} parent=1 // pred_region
      %s32 = ssub.s32 4096, 4096
      %33 = vsyncadd [#allocation6], %s32
      %s34 = sshll.u32 [#allocation5], 4
      %s35 = int_to_ptr.vmem [resolvable:$true] %s34
      %40 = dma.hbm_to_vmem [thread:$0]  %s3, 4096, %s35, [#allocation6], 64, 64, 4
    $region17: #{_lambda_.1} parent=1 // pred_fallthru
      _
    // Predicated region
    $region18: #{_lambda_.1} parent=1 // pred_check
      _
    $region19: #{_lambda_.1} parent=1 // pred_check_branch
      %42 = sbr.rel (0) target = $region21
    $region20: #{_lambda_.1} parent=1 // pred_region
      _
    $region21: #{_lambda_.1} parent=1 // pred_fallthru
      _
    // Predicated region
    $region22: #{_lambda_.1} parent=1 // pred_check
      _
    $region23: #{_lambda_.1} parent=1 // pred_check_branch
      %44 = sbr.rel (0) target = $region25
    $region24: #{_lambda_.1} parent=1 // pred_region
      %45 = dma.done [#allocation3], 8192
    $region25: #{_lambda_.1} parent=1 // pred_fallthru
      _
    // Predicated region
    $region26: #{_lambda_.1} parent=1 // pred_check
      _
    $region27: #{_lambda_.1} parent=1 // pred_check_branch
      %47 = sbr.rel (0) target = $region29
    $region28: #{_lambda_.1} parent=1 // pred_region
      %48 = dma.done [#allocation6], 4096
    $region29: #{_lambda_.1} parent=1 // pred_fallthru
      _
    %v50 = vld [vmem:[%s0] sm:$0xff]
    %v51 = vld [vmem:[#allocation2] sm:$0xff]
    %v52 = vld [vmem:[#allocation2 + $0x8] sm:$0xff]
    %v53 = vld [vmem:[#allocation2 + $0x10] sm:$0xff]
    %v54 = vld [vmem:[#allocation2 + $0x18] sm:$0xff]
    %v55 = vld [vmem:[#allocation2 + $0x20] sm:$0xff]
    %v56 = vld [vmem:[#allocation2 + $0x28] sm:$0xff]
    %v57 = vld [vmem:[#allocation2 + $0x30] sm:$0xff]
    %v58 = vld [vmem:[#allocation2 + $0x38] sm:$0xff]
    %v59 = vld [vmem:[#allocation2 + $0x40] sm:$0xff]
    %v60 = vld [vmem:[#allocation2 + $0x48] sm:$0xff]
    %v61 = vld [vmem:[#allocation2 + $0x50] sm:$0xff]
    %v62 = vld [vmem:[#allocation2 + $0x58] sm:$0xff]
    %v63 = vld [vmem:[#allocation2 + $0x60] sm:$0xff]
    %v64 = vld [vmem:[#allocation2 + $0x68] sm:$0xff]
    %v65 = vld [vmem:[#allocation2 + $0x70] sm:$0xff]
    %v66 = vld [vmem:[#allocation2 + $0x78] sm:$0xff]
    %v67 = vld [vmem:[#allocation2 + $0x80] sm:$0xff]
    %v68 = vld [vmem:[#allocation2 + $0x88] sm:$0xff]
    %v69 = vld [vmem:[#allocation2 + $0x90] sm:$0xff]
    %v70 = vld [vmem:[#allocation2 + $0x98] sm:$0xff]
    %v71 = vld [vmem:[#allocation2 + $0xa0] sm:$0xff]
    %v72 = vld [vmem:[#allocation2 + $0xa8] sm:$0xff]
    %v73 = vld [vmem:[#allocation2 + $0xb0] sm:$0xff]
    %v74 = vld [vmem:[#allocation2 + $0xb8] sm:$0xff]
    %v75 = vld [vmem:[#allocation2 + $0xc0] sm:$0xff]
    %v76 = vld [vmem:[#allocation2 + $0xc8] sm:$0xff]
    %v77 = vld [vmem:[#allocation2 + $0xd0] sm:$0xff]
    %v78 = vld [vmem:[#allocation2 + $0xd8] sm:$0xff]
    %v79 = vld [vmem:[#allocation2 + $0xe0] sm:$0xff]
    %v80 = vld [vmem:[#allocation2 + $0xe8] sm:$0xff]
    %v81 = vld [vmem:[#allocation2 + $0xf0] sm:$0xff]
    %v82 = vld [vmem:[#allocation2 + $0xf8] sm:$0xff]
    %v83 = vld [vmem:[#allocation2 + $0x100] sm:$0xff]
    %v84 = vld [vmem:[#allocation2 + $0x108] sm:$0xff]
    %v85 = vld [vmem:[#allocation2 + $0x110] sm:$0xff]
    %v86 = vld [vmem:[#allocation2 + $0x118] sm:$0xff]
    %v87 = vld [vmem:[#allocation2 + $0x120] sm:$0xff]
    %v88 = vld [vmem:[#allocation2 + $0x128] sm:$0xff]
    %v89 = vld [vmem:[#allocation2 + $0x130] sm:$0xff]
    %v90 = vld [vmem:[#allocation2 + $0x138] sm:$0xff]
    %v91 = vld [vmem:[#allocation2 + $0x140] sm:$0xff]
    %v92 = vld [vmem:[#allocation2 + $0x148] sm:$0xff]
    %v93 = vld [vmem:[#allocation2 + $0x150] sm:$0xff]
    %v94 = vld [vmem:[#allocation2 + $0x158] sm:$0xff]
    %v95 = vld [vmem:[#allocation2 + $0x160] sm:$0xff]
    %v96 = vld [vmem:[#allocation2 + $0x168] sm:$0xff]
    %v97 = vld [vmem:[#allocation2 + $0x170] sm:$0xff]
    %v98 = vld [vmem:[#allocation2 + $0x178] sm:$0xff]
    %v99 = vld [vmem:[#allocation2 + $0x180] sm:$0xff]
    %v100 = vld [vmem:[#allocation2 + $0x188] sm:$0xff]
    %v101 = vld [vmem:[#allocation2 + $0x190] sm:$0xff]
    %v102 = vld [vmem:[#allocation2 + $0x198] sm:$0xff]
    %v103 = vld [vmem:[#allocation2 + $0x1a0] sm:$0xff]
    %v104 = vld [vmem:[#allocation2 + $0x1a8] sm:$0xff]
    %v105 = vld [vmem:[#allocation2 + $0x1b0] sm:$0xff]
    %v106 = vld [vmem:[#allocation2 + $0x1b8] sm:$0xff]
    %v107 = vld [vmem:[#allocation2 + $0x1c0] sm:$0xff]
    %v108 = vld [vmem:[#allocation2 + $0x1c8] sm:$0xff]
    %v109 = vld [vmem:[#allocation2 + $0x1d0] sm:$0xff]
    %v110 = vld [vmem:[#allocation2 + $0x1d8] sm:$0xff]
    %v111 = vld [vmem:[#allocation2 + $0x1e0] sm:$0xff]
    %v112 = vld [vmem:[#allocation2 + $0x1e8] sm:$0xff]
    %v113 = vld [vmem:[#allocation2 + $0x1f0] sm:$0xff]
    %v114 = vld [vmem:[#allocation2 + $0x1f8] sm:$0xff]
    %v115 = vld [vmem:[%s2] sm:$0xf]
    %v117 = vlaneseq
    %v118 = vshrl.u32 %v117, 7
    %v119 = vsub.s32 0, %v118
    %v120 = vrot.slane %v115, %v119
    %v121 = vlaneseq
    %v122 = vshrl.u32 %v121, 7
    %v123 = vsub.s32 1, %v122
    %v124 = vrot.slane %v115, %v123
    %v125 = vlaneseq
    %v126 = vshrl.u32 %v125, 7
    %v127 = vsub.s32 2, %v126
    %v128 = vrot.slane %v115, %v127
    %v129 = vlaneseq
    %v130 = vshrl.u32 %v129, 7
    %v131 = vsub.s32 3, %v130
    %v132 = vrot.slane %v115, %v131
    %v138 = vunpack.c.l.b16 %v50
    %v139 = vunpack.c.h.b16 %v50
    %v140 = vpack.c.b16 %v138, %v138
    %v141 = vpack.c.b16 %v139, %v139
    %v208 = vunpack.c.l.b16 %v51
    %v209 = vunpack.c.h.b16 %v51
    %v210 = vunpack.c.l.b16 %v52
    %v211 = vunpack.c.h.b16 %v52
    %v212 = vunpack.c.l.b16 %v53
    %v213 = vunpack.c.h.b16 %v53
    %v214 = vunpack.c.l.b16 %v54
    %v215 = vunpack.c.h.b16 %v54
    %v216 = vunpack.c.l.b16 %v55
    %v217 = vunpack.c.h.b16 %v55
    %v218 = vunpack.c.l.b16 %v56
    %v219 = vunpack.c.h.b16 %v56
    %v220 = vunpack.c.l.b16 %v57
    %v221 = vunpack.c.h.b16 %v57
    %v222 = vunpack.c.l.b16 %v58
    %v223 = vunpack.c.h.b16 %v58
    %v224 = vunpack.c.l.b16 %v59
    %v225 = vunpack.c.h.b16 %v59
    %v226 = vunpack.c.l.b16 %v60
    %v227 = vunpack.c.h.b16 %v60
    %v228 = vunpack.c.l.b16 %v61
    %v229 = vunpack.c.h.b16 %v61
    %v230 = vunpack.c.l.b16 %v62
    %v231 = vunpack.c.h.b16 %v62
    %v232 = vunpack.c.l.b16 %v63
    %v233 = vunpack.c.h.b16 %v63
    %v234 = vunpack.c.l.b16 %v64
    %v235 = vunpack.c.h.b16 %v64
    %v236 = vunpack.c.l.b16 %v65
    %v237 = vunpack.c.h.b16 %v65
    %v238 = vunpack.c.l.b16 %v66
    %v239 = vunpack.c.h.b16 %v66
    %v240 = vunpack.c.l.b16 %v67
    %v241 = vunpack.c.h.b16 %v67
    %v242 = vunpack.c.l.b16 %v68
    %v243 = vunpack.c.h.b16 %v68
    %v244 = vunpack.c.l.b16 %v69
    %v245 = vunpack.c.h.b16 %v69
    %v246 = vunpack.c.l.b16 %v70
    %v247 = vunpack.c.h.b16 %v70
    %v248 = vunpack.c.l.b16 %v71
    %v249 = vunpack.c.h.b16 %v71
    %v250 = vunpack.c.l.b16 %v72
    %v251 = vunpack.c.h.b16 %v72
    %v252 = vunpack.c.l.b16 %v73
    %v253 = vunpack.c.h.b16 %v73
    %v254 = vunpack.c.l.b16 %v74
    %v255 = vunpack.c.h.b16 %v74
    %v256 = vunpack.c.l.b16 %v75
    %v257 = vunpack.c.h.b16 %v75
    %v258 = vunpack.c.l.b16 %v76
    %v259 = vunpack.c.h.b16 %v76
    %v260 = vunpack.c.l.b16 %v77
    %v261 = vunpack.c.h.b16 %v77
    %v262 = vunpack.c.l.b16 %v78
    %v263 = vunpack.c.h.b16 %v78
    %v264 = vunpack.c.l.b16 %v79
    %v265 = vunpack.c.h.b16 %v79
    %v266 = vunpack.c.l.b16 %v80
    %v267 = vunpack.c.h.b16 %v80
    %v268 = vunpack.c.l.b16 %v81
    %v269 = vunpack.c.h.b16 %v81
    %v270 = vunpack.c.l.b16 %v82
    %v271 = vunpack.c.h.b16 %v82
    %v272 = vunpack.c.l.b16 %v83
    %v273 = vunpack.c.h.b16 %v83
    %v274 = vunpack.c.l.b16 %v84
    %v275 = vunpack.c.h.b16 %v84
    %v276 = vunpack.c.l.b16 %v85
    %v277 = vunpack.c.h.b16 %v85
    %v278 = vunpack.c.l.b16 %v86
    %v279 = vunpack.c.h.b16 %v86
    %v280 = vunpack.c.l.b16 %v87
    %v281 = vunpack.c.h.b16 %v87
    %v282 = vunpack.c.l.b16 %v88
    %v283 = vunpack.c.h.b16 %v88
    %v284 = vunpack.c.l.b16 %v89
    %v285 = vunpack.c.h.b16 %v89
    %v286 = vunpack.c.l.b16 %v90
    %v287 = vunpack.c.h.b16 %v90
    %v288 = vunpack.c.l.b16 %v91
    %v289 = vunpack.c.h.b16 %v91
    %v290 = vunpack.c.l.b16 %v92
    %v291 = vunpack.c.h.b16 %v92
    %v292 = vunpack.c.l.b16 %v93
    %v293 = vunpack.c.h.b16 %v93
    %v294 = vunpack.c.l.b16 %v94
    %v295 = vunpack.c.h.b16 %v94
    %v296 = vunpack.c.l.b16 %v95
    %v297 = vunpack.c.h.b16 %v95
    %v298 = vunpack.c.l.b16 %v96
    %v299 = vunpack.c.h.b16 %v96
    %v300 = vunpack.c.l.b16 %v97
    %v301 = vunpack.c.h.b16 %v97
    %v302 = vunpack.c.l.b16 %v98
    %v303 = vunpack.c.h.b16 %v98
    %v304 = vunpack.c.l.b16 %v99
    %v305 = vunpack.c.h.b16 %v99
    %v306 = vunpack.c.l.b16 %v100
    %v307 = vunpack.c.h.b16 %v100
    %v308 = vunpack.c.l.b16 %v101
    %v309 = vunpack.c.h.b16 %v101
    %v310 = vunpack.c.l.b16 %v102
    %v311 = vunpack.c.h.b16 %v102
    %v312 = vunpack.c.l.b16 %v103
    %v313 = vunpack.c.h.b16 %v103
    %v314 = vunpack.c.l.b16 %v104
    %v315 = vunpack.c.h.b16 %v104
    %v316 = vunpack.c.l.b16 %v105
    %v317 = vunpack.c.h.b16 %v105
    %v318 = vunpack.c.l.b16 %v106
    %v319 = vunpack.c.h.b16 %v106
    %v320 = vunpack.c.l.b16 %v107
    %v321 = vunpack.c.h.b16 %v107
    %v322 = vunpack.c.l.b16 %v108
    %v323 = vunpack.c.h.b16 %v108
    %v324 = vunpack.c.l.b16 %v109
    %v325 = vunpack.c.h.b16 %v109
    %v326 = vunpack.c.l.b16 %v110
    %v327 = vunpack.c.h.b16 %v110
    %v328 = vunpack.c.l.b16 %v111
    %v329 = vunpack.c.h.b16 %v111
    %v330 = vunpack.c.l.b16 %v112
    %v331 = vunpack.c.h.b16 %v112
    %v332 = vunpack.c.l.b16 %v113
    %v333 = vunpack.c.h.b16 %v113
    %v334 = vunpack.c.l.b16 %v114
    %v335 = vunpack.c.h.b16 %v114
    %v336 = vpack.c.b16 %v212, %v208
    %v337 = vpack.c.b16 %v213, %v209
    %v338 = vpack.c.b16 %v214, %v210
    %v339 = vpack.c.b16 %v215, %v211
    %v340 = vpack.c.b16 %v220, %v216
    %v341 = vpack.c.b16 %v221, %v217
    %v342 = vpack.c.b16 %v222, %v218
    %v343 = vpack.c.b16 %v223, %v219
    %v344 = vpack.c.b16 %v228, %v224
    %v345 = vpack.c.b16 %v229, %v225
    %v346 = vpack.c.b16 %v230, %v226
    %v347 = vpack.c.b16 %v231, %v227
    %v348 = vpack.c.b16 %v236, %v232
    %v349 = vpack.c.b16 %v237, %v233
    %v350 = vpack.c.b16 %v238, %v234
    %v351 = vpack.c.b16 %v239, %v235
    %v352 = vpack.c.b16 %v244, %v240
    %v353 = vpack.c.b16 %v245, %v241
    %v354 = vpack.c.b16 %v246, %v242
    %v355 = vpack.c.b16 %v247, %v243
    %v356 = vpack.c.b16 %v252, %v248
    %v357 = vpack.c.b16 %v253, %v249
    %v358 = vpack.c.b16 %v254, %v250
    %v359 = vpack.c.b16 %v255, %v251
    %v360 = vpack.c.b16 %v260, %v256
    %v361 = vpack.c.b16 %v261, %v257
    %v362 = vpack.c.b16 %v262, %v258
    %v363 = vpack.c.b16 %v263, %v259
    %v364 = vpack.c.b16 %v268, %v264
    %v365 = vpack.c.b16 %v269, %v265
    %v366 = vpack.c.b16 %v270, %v266
    %v367 = vpack.c.b16 %v271, %v267
    %v368 = vpack.c.b16 %v276, %v272
    %v369 = vpack.c.b16 %v277, %v273
    %v370 = vpack.c.b16 %v278, %v274
    %v371 = vpack.c.b16 %v279, %v275
    %v372 = vpack.c.b16 %v284, %v280
    %v373 = vpack.c.b16 %v285, %v281
    %v374 = vpack.c.b16 %v286, %v282
    %v375 = vpack.c.b16 %v287, %v283
    %v376 = vpack.c.b16 %v292, %v288
    %v377 = vpack.c.b16 %v293, %v289
    %v378 = vpack.c.b16 %v294, %v290
    %v379 = vpack.c.b16 %v295, %v291
    %v380 = vpack.c.b16 %v300, %v296
    %v381 = vpack.c.b16 %v301, %v297
    %v382 = vpack.c.b16 %v302, %v298
    %v383 = vpack.c.b16 %v303, %v299
    %v384 = vpack.c.b16 %v308, %v304
    %v385 = vpack.c.b16 %v309, %v305
    %v386 = vpack.c.b16 %v310, %v306
    %v387 = vpack.c.b16 %v311, %v307
    %v388 = vpack.c.b16 %v316, %v312
    %v389 = vpack.c.b16 %v317, %v313
    %v390 = vpack.c.b16 %v318, %v314
    %v391 = vpack.c.b16 %v319, %v315
    %v392 = vpack.c.b16 %v324, %v320
    %v393 = vpack.c.b16 %v325, %v321
    %v394 = vpack.c.b16 %v326, %v322
    %v395 = vpack.c.b16 %v327, %v323
    %v396 = vpack.c.b16 %v332, %v328
    %v397 = vpack.c.b16 %v333, %v329
    %v398 = vpack.c.b16 %v334, %v330
    %v399 = vpack.c.b16 %v335, %v331
    %464 = vmatprep.subr.bf16.mxu0 %v337
    %465 = vmatpush1.bf16.msra.mxu0 %v336
    %466 = vmatprep.subr.bf16.mxu0 %v341
    %467 = vmatpush1.bf16.msra.mxu0 %v340
    %468 = vmatprep.subr.bf16.mxu0 %v345
    %469 = vmatpush1.bf16.msra.mxu0 %v344
    %470 = vmatprep.subr.bf16.mxu0 %v349
    %471 = vmatpush1.bf16.msra.mxu0 %v348
    %472 = vmatprep.subr.bf16.mxu0 %v353
    %473 = vmatpush1.bf16.msra.mxu0 %v352
    %474 = vmatprep.subr.bf16.mxu0 %v357
    %475 = vmatpush1.bf16.msra.mxu0 %v356
    %476 = vmatprep.subr.bf16.mxu0 %v361
    %477 = vmatpush1.bf16.msra.mxu0 %v360
    %478 = vmatprep.subr.bf16.mxu0 %v365
    %479 = vmatpush1.bf16.msra.mxu0 %v364
    %480 = vmatprep.subr.bf16.mxu0 %v369
    %481 = vmatpush1.bf16.msra.mxu0 %v368
    %482 = vmatprep.subr.bf16.mxu0 %v373
    %483 = vmatpush1.bf16.msra.mxu0 %v372
    %484 = vmatprep.subr.bf16.mxu0 %v377
    %485 = vmatpush1.bf16.msra.mxu0 %v376
    %486 = vmatprep.subr.bf16.mxu0 %v381
    %487 = vmatpush1.bf16.msra.mxu0 %v380
    %488 = vmatprep.subr.bf16.mxu0 %v385
    %489 = vmatpush1.bf16.msra.mxu0 %v384
    %490 = vmatprep.subr.bf16.mxu0 %v389
    %491 = vmatpush1.bf16.msra.mxu0 %v388
    %492 = vmatprep.subr.bf16.mxu0 %v393
    %493 = vmatpush1.bf16.msra.mxu0 %v392
    %494 = vmatprep.subr.bf16.mxu0 %v397
    %495 = vmatpush1.bf16.msra.mxu0 %v396
    %496 = vmatprep.mubr.bf16.mxu0 %v141
    %497 = vmatmul.mubr.bf16.gmra.mrb[0].mxu0 %v140
    %v498 = vpop.f32.mrb[0].mxu0
    %v499 = vadd.f32 %v120, %v498
    %v500 = vpop.f32.mrb[0].mxu0
    %v501 = vadd.f32 %v124, %v500
    %v502 = vpop.f32.mrb[0].mxu0
    %v503 = vpop.f32.mrb[0].mxu0
    %504 = vdwg.mxu0
    %505 = vmatprep.subr.bf16.mxu0 %v339
    %506 = vmatpush1.bf16.msra.mxu0 %v338
    %507 = vmatprep.subr.bf16.mxu0 %v343
    %508 = vmatpush1.bf16.msra.mxu0 %v342
    %509 = vmatprep.subr.bf16.mxu0 %v347
    %510 = vmatpush1.bf16.msra.mxu0 %v346
    %511 = vmatprep.subr.bf16.mxu0 %v351
    %512 = vmatpush1.bf16.msra.mxu0 %v350
    %513 = vmatprep.subr.bf16.mxu0 %v355
    %514 = vmatpush1.bf16.msra.mxu0 %v354
    %515 = vmatprep.subr.bf16.mxu0 %v359
    %516 = vmatpush1.bf16.msra.mxu0 %v358
    %517 = vmatprep.subr.bf16.mxu0 %v363
    %518 = vmatpush1.bf16.msra.mxu0 %v362
    %519 = vmatprep.subr.bf16.mxu0 %v367
    %520 = vmatpush1.bf16.msra.mxu0 %v366
    %521 = vmatprep.subr.bf16.mxu0 %v371
    %522 = vmatpush1.bf16.msra.mxu0 %v370
    %523 = vmatprep.subr.bf16.mxu0 %v375
    %524 = vmatpush1.bf16.msra.mxu0 %v374
    %525 = vmatprep.subr.bf16.mxu0 %v379
    %526 = vmatpush1.bf16.msra.mxu0 %v378
    %527 = vmatprep.subr.bf16.mxu0 %v383
    %528 = vmatpush1.bf16.msra.mxu0 %v382
    %529 = vmatprep.subr.bf16.mxu0 %v387
    %530 = vmatpush1.bf16.msra.mxu0 %v386
    %531 = vmatprep.subr.bf16.mxu0 %v391
    %532 = vmatpush1.bf16.msra.mxu0 %v390
    %533 = vmatprep.subr.bf16.mxu0 %v395
    %534 = vmatpush1.bf16.msra.mxu0 %v394
    %535 = vmatprep.subr.bf16.mxu0 %v399
    %536 = vmatpush1.bf16.msra.mxu0 %v398
    %537 = vmatprep.mubr.bf16.mxu0 %v141
    %538 = vmatmul.mubr.bf16.gmra.mrb[0].mxu0 %v140
    %v539 = vpop.f32.mrb[0].mxu0
    %v540 = vadd.f32 %v128, %v539
    %v541 = vpop.f32.mrb[0].mxu0
    %v542 = vadd.f32 %v132, %v541
    %v543 = vpop.f32.mrb[0].mxu0
    %v544 = vpop.f32.mrb[0].mxu0
    %545 = vdwg.mxu0
    %v546 = vmax.f32 %v499, 0.0
    %v547 = vmax.f32 %v501, 0.0
    %v548 = vmax.f32 %v540, 0.0
    %v549 = vmax.f32 %v542, 0.0
    %v550 = vpack.c.bf16 %v546, %v546
    %v551 = vpack.c.bf16 %v547, %v547
    %v552 = vpack.c.bf16 %v548, %v548
    %v553 = vpack.c.bf16 %v549, %v549
    %v554 = vld [vmem:[#allocation5] sm:$0xf]
    %v555 = vld [vmem:[#allocation5 + $0x4] sm:$0xf]
    %v556 = vld [vmem:[#allocation5 + $0x8] sm:$0xf]
    %v557 = vld [vmem:[#allocation5 + $0xc] sm:$0xf]
    %v558 = vld [vmem:[#allocation5 + $0x10] sm:$0xf]
    %v559 = vld [vmem:[#allocation5 + $0x14] sm:$0xf]
    %v560 = vld [vmem:[#allocation5 + $0x18] sm:$0xf]
    %v561 = vld [vmem:[#allocation5 + $0x1c] sm:$0xf]
    %v562 = vld [vmem:[#allocation5 + $0x20] sm:$0xf]
    %v563 = vld [vmem:[#allocation5 + $0x24] sm:$0xf]
    %v564 = vld [vmem:[#allocation5 + $0x28] sm:$0xf]
    %v565 = vld [vmem:[#allocation5 + $0x2c] sm:$0xf]
    %v566 = vld [vmem:[#allocation5 + $0x30] sm:$0xf]
    %v567 = vld [vmem:[#allocation5 + $0x34] sm:$0xf]
    %v568 = vld [vmem:[#allocation5 + $0x38] sm:$0xf]
    %v569 = vld [vmem:[#allocation5 + $0x3c] sm:$0xf]
    %v570 = vld [vmem:[#allocation5 + $0x40] sm:$0xf]
    %v571 = vld [vmem:[#allocation5 + $0x44] sm:$0xf]
    %v572 = vld [vmem:[#allocation5 + $0x48] sm:$0xf]
    %v573 = vld [vmem:[#allocation5 + $0x4c] sm:$0xf]
    %v574 = vld [vmem:[#allocation5 + $0x50] sm:$0xf]
    %v575 = vld [vmem:[#allocation5 + $0x54] sm:$0xf]
    %v576 = vld [vmem:[#allocation5 + $0x58] sm:$0xf]
    %v577 = vld [vmem:[#allocation5 + $0x5c] sm:$0xf]
    %v578 = vld [vmem:[#allocation5 + $0x60] sm:$0xf]
    %v579 = vld [vmem:[#allocation5 + $0x64] sm:$0xf]
    %v580 = vld [vmem:[#allocation5 + $0x68] sm:$0xf]
    %v581 = vld [vmem:[#allocation5 + $0x6c] sm:$0xf]
    %v582 = vld [vmem:[#allocation5 + $0x70] sm:$0xf]
    %v583 = vld [vmem:[#allocation5 + $0x74] sm:$0xf]
    %v584 = vld [vmem:[#allocation5 + $0x78] sm:$0xf]
    %v585 = vld [vmem:[#allocation5 + $0x7c] sm:$0xf]
    %v586 = vld [vmem:[#allocation5 + $0x80] sm:$0xf]
    %v587 = vld [vmem:[#allocation5 + $0x84] sm:$0xf]
    %v588 = vld [vmem:[#allocation5 + $0x88] sm:$0xf]
    %v589 = vld [vmem:[#allocation5 + $0x8c] sm:$0xf]
    %v590 = vld [vmem:[#allocation5 + $0x90] sm:$0xf]
    %v591 = vld [vmem:[#allocation5 + $0x94] sm:$0xf]
    %v592 = vld [vmem:[#allocation5 + $0x98] sm:$0xf]
    %v593 = vld [vmem:[#allocation5 + $0x9c] sm:$0xf]
    %v594 = vld [vmem:[#allocation5 + $0xa0] sm:$0xf]
    %v595 = vld [vmem:[#allocation5 + $0xa4] sm:$0xf]
    %v596 = vld [vmem:[#allocation5 + $0xa8] sm:$0xf]
    %v597 = vld [vmem:[#allocation5 + $0xac] sm:$0xf]
    %v598 = vld [vmem:[#allocation5 + $0xb0] sm:$0xf]
    %v599 = vld [vmem:[#allocation5 + $0xb4] sm:$0xf]
    %v600 = vld [vmem:[#allocation5 + $0xb8] sm:$0xf]
    %v601 = vld [vmem:[#allocation5 + $0xbc] sm:$0xf]
    %v602 = vld [vmem:[#allocation5 + $0xc0] sm:$0xf]
    %v603 = vld [vmem:[#allocation5 + $0xc4] sm:$0xf]
    %v604 = vld [vmem:[#allocation5 + $0xc8] sm:$0xf]
    %v605 = vld [vmem:[#allocation5 + $0xcc] sm:$0xf]
    %v606 = vld [vmem:[#allocation5 + $0xd0] sm:$0xf]
    %v607 = vld [vmem:[#allocation5 + $0xd4] sm:$0xf]
    %v608 = vld [vmem:[#allocation5 + $0xd8] sm:$0xf]
    %v609 = vld [vmem:[#allocation5 + $0xdc] sm:$0xf]
    %v610 = vld [vmem:[#allocation5 + $0xe0] sm:$0xf]
    %v611 = vld [vmem:[#allocation5 + $0xe4] sm:$0xf]
    %v612 = vld [vmem:[#allocation5 + $0xe8] sm:$0xf]
    %v613 = vld [vmem:[#allocation5 + $0xec] sm:$0xf]
    %v614 = vld [vmem:[#allocation5 + $0xf0] sm:$0xf]
    %v615 = vld [vmem:[#allocation5 + $0xf4] sm:$0xf]
    %v616 = vld [vmem:[#allocation5 + $0xf8] sm:$0xf]
    %v617 = vld [vmem:[#allocation5 + $0xfc] sm:$0xf]
    %v618 = vld [vmem:[%s4] sm:$0x1]
    %v620 = vlaneseq
    %v621 = vshrl.u32 %v620, 7
    %v622 = vsub.s32 0, %v621
    %v623 = vrot.slane %v618, %v622
    %v689 = vunpack.c.l.b16 %v554
    %v690 = vunpack.c.l.b16 %v555
    %v691 = vunpack.c.l.b16 %v556
    %v692 = vunpack.c.l.b16 %v557
    %v693 = vunpack.c.l.b16 %v558
    %v694 = vunpack.c.l.b16 %v559
    %v695 = vunpack.c.l.b16 %v560
    %v696 = vunpack.c.l.b16 %v561
    %v697 = vunpack.c.l.b16 %v562
    %v698 = vunpack.c.l.b16 %v563
    %v699 = vunpack.c.l.b16 %v564
    %v700 = vunpack.c.l.b16 %v565
    %v701 = vunpack.c.l.b16 %v566
    %v702 = vunpack.c.l.b16 %v567
    %v703 = vunpack.c.l.b16 %v568
    %v704 = vunpack.c.l.b16 %v569
    %v705 = vunpack.c.l.b16 %v570
    %v706 = vunpack.c.l.b16 %v571
    %v707 = vunpack.c.l.b16 %v572
    %v708 = vunpack.c.l.b16 %v573
    %v709 = vunpack.c.l.b16 %v574
    %v710 = vunpack.c.l.b16 %v575
    %v711 = vunpack.c.l.b16 %v576
    %v712 = vunpack.c.l.b16 %v577
    %v713 = vunpack.c.l.b16 %v578
    %v714 = vunpack.c.l.b16 %v579
    %v715 = vunpack.c.l.b16 %v580
    %v716 = vunpack.c.l.b16 %v581
    %v717 = vunpack.c.l.b16 %v582
    %v718 = vunpack.c.l.b16 %v583
    %v719 = vunpack.c.l.b16 %v584
    %v720 = vunpack.c.l.b16 %v585
    %v721 = vunpack.c.l.b16 %v586
    %v722 = vunpack.c.l.b16 %v587
    %v723 = vunpack.c.l.b16 %v588
    %v724 = vunpack.c.l.b16 %v589
    %v725 = vunpack.c.l.b16 %v590
    %v726 = vunpack.c.l.b16 %v591
    %v727 = vunpack.c.l.b16 %v592
    %v728 = vunpack.c.l.b16 %v593
    %v729 = vunpack.c.l.b16 %v594
    %v730 = vunpack.c.l.b16 %v595
    %v731 = vunpack.c.l.b16 %v596
    %v732 = vunpack.c.l.b16 %v597
    %v733 = vunpack.c.l.b16 %v598
    %v734 = vunpack.c.l.b16 %v599
    %v735 = vunpack.c.l.b16 %v600
    %v736 = vunpack.c.l.b16 %v601
    %v737 = vunpack.c.l.b16 %v602
    %v738 = vunpack.c.l.b16 %v603
    %v739 = vunpack.c.l.b16 %v604
    %v740 = vunpack.c.l.b16 %v605
    %v741 = vunpack.c.l.b16 %v606
    %v742 = vunpack.c.l.b16 %v607
    %v743 = vunpack.c.l.b16 %v608
    %v744 = vunpack.c.l.b16 %v609
    %v745 = vunpack.c.l.b16 %v610
    %v746 = vunpack.c.l.b16 %v611
    %v747 = vunpack.c.l.b16 %v612
    %v748 = vunpack.c.l.b16 %v613
    %v749 = vunpack.c.l.b16 %v614
    %v750 = vunpack.c.l.b16 %v615
    %v751 = vunpack.c.l.b16 %v616
    %v752 = vunpack.c.l.b16 %v617
    %v753 = vpack.c.b16 %v690, %v689
    %v754 = vpack.c.b16 %v692, %v691
    %v755 = vpack.c.b16 %v694, %v693
    %v756 = vpack.c.b16 %v696, %v695
    %v757 = vpack.c.b16 %v698, %v697
    %v758 = vpack.c.b16 %v700, %v699
    %v759 = vpack.c.b16 %v702, %v701
    %v760 = vpack.c.b16 %v704, %v703
    %v761 = vpack.c.b16 %v706, %v705
    %v762 = vpack.c.b16 %v708, %v707
    %v763 = vpack.c.b16 %v710, %v709
    %v764 = vpack.c.b16 %v712, %v711
    %v765 = vpack.c.b16 %v714, %v713
    %v766 = vpack.c.b16 %v716, %v715
    %v767 = vpack.c.b16 %v718, %v717
    %v768 = vpack.c.b16 %v720, %v719
    %v769 = vpack.c.b16 %v722, %v721
    %v770 = vpack.c.b16 %v724, %v723
    %v771 = vpack.c.b16 %v726, %v725
    %v772 = vpack.c.b16 %v728, %v727
    %v773 = vpack.c.b16 %v730, %v729
    %v774 = vpack.c.b16 %v732, %v731
    %v775 = vpack.c.b16 %v734, %v733
    %v776 = vpack.c.b16 %v736, %v735
    %v777 = vpack.c.b16 %v738, %v737
    %v778 = vpack.c.b16 %v740, %v739
    %v779 = vpack.c.b16 %v742, %v741
    %v780 = vpack.c.b16 %v744, %v743
    %v781 = vpack.c.b16 %v746, %v745
    %v782 = vpack.c.b16 %v748, %v747
    %v783 = vpack.c.b16 %v750, %v749
    %v784 = vpack.c.b16 %v752, %v751
    %817 = vmatprep.subr.bf16.mxu0 0
    %818 = vmatpush1.bf16.msra.mxu0 %v753
    %819 = vmatprep.subr.bf16.mxu0 0
    %820 = vmatpush1.bf16.msra.mxu0 %v754
    %821 = vmatprep.subr.bf16.mxu0 0
    %822 = vmatpush1.bf16.msra.mxu0 %v755
    %823 = vmatprep.subr.bf16.mxu0 0
    %824 = vmatpush1.bf16.msra.mxu0 %v756
    %825 = vmatprep.subr.bf16.mxu0 0
    %826 = vmatpush1.bf16.msra.mxu0 %v757
    %827 = vmatprep.subr.bf16.mxu0 0
    %828 = vmatpush1.bf16.msra.mxu0 %v758
    %829 = vmatprep.subr.bf16.mxu0 0
    %830 = vmatpush1.bf16.msra.mxu0 %v759
    %831 = vmatprep.subr.bf16.mxu0 0
    %832 = vmatpush1.bf16.msra.mxu0 %v760
    %833 = vmatprep.subr.bf16.mxu0 0
    %834 = vmatpush1.bf16.msra.mxu0 %v761
    %835 = vmatprep.subr.bf16.mxu0 0
    %836 = vmatpush1.bf16.msra.mxu0 %v762
    %837 = vmatprep.subr.bf16.mxu0 0
    %838 = vmatpush1.bf16.msra.mxu0 %v763
    %839 = vmatprep.subr.bf16.mxu0 0
    %840 = vmatpush1.bf16.msra.mxu0 %v764
    %841 = vmatprep.subr.bf16.mxu0 0
    %842 = vmatpush1.bf16.msra.mxu0 %v765
    %843 = vmatprep.subr.bf16.mxu0 0
    %844 = vmatpush1.bf16.msra.mxu0 %v766
    %845 = vmatprep.subr.bf16.mxu0 0
    %846 = vmatpush1.bf16.msra.mxu0 %v767
    %847 = vmatprep.subr.bf16.mxu0 0
    %848 = vmatpush1.bf16.msra.mxu0 %v768
    %849 = vmatprep.mubr.bf16.mxu0 %v551
    %850 = vmatmul.mubr.bf16.gmra.mrb[0].mxu0 %v550
    %v851 = vpop.f32.mrb[0].mxu0
    %v852 = vadd.f32 %v623, %v851
    %v853 = vpop.f32.mrb[0].mxu0
    %v854 = vpop.f32.mrb[0].mxu0
    %v855 = vpop.f32.mrb[0].mxu0
    %856 = vdwg.mxu0
    %857 = vmatprep.subr.bf16.mxu0 0
    %858 = vmatpush1.bf16.msra.mxu0 %v769
    %859 = vmatprep.subr.bf16.mxu0 0
    %860 = vmatpush1.bf16.msra.mxu0 %v770
    %861 = vmatprep.subr.bf16.mxu0 0
    %862 = vmatpush1.bf16.msra.mxu0 %v771
    %863 = vmatprep.subr.bf16.mxu0 0
    %864 = vmatpush1.bf16.msra.mxu0 %v772
    %865 = vmatprep.subr.bf16.mxu0 0
    %866 = vmatpush1.bf16.msra.mxu0 %v773
    %867 = vmatprep.subr.bf16.mxu0 0
    %868 = vmatpush1.bf16.msra.mxu0 %v774
    %869 = vmatprep.subr.bf16.mxu0 0
    %870 = vmatpush1.bf16.msra.mxu0 %v775
    %871 = vmatprep.subr.bf16.mxu0 0
    %872 = vmatpush1.bf16.msra.mxu0 %v776
    %873 = vmatprep.subr.bf16.mxu0 0
    %874 = vmatpush1.bf16.msra.mxu0 %v777
    %875 = vmatprep.subr.bf16.mxu0 0
    %876 = vmatpush1.bf16.msra.mxu0 %v778
    %877 = vmatprep.subr.bf16.mxu0 0
    %878 = vmatpush1.bf16.msra.mxu0 %v779
    %879 = vmatprep.subr.bf16.mxu0 0
    %880 = vmatpush1.bf16.msra.mxu0 %v780
    %881 = vmatprep.subr.bf16.mxu0 0
    %882 = vmatpush1.bf16.msra.mxu0 %v781
    %883 = vmatprep.subr.bf16.mxu0 0
    %884 = vmatpush1.bf16.msra.mxu0 %v782
    %885 = vmatprep.subr.bf16.mxu0 0
    %886 = vmatpush1.bf16.msra.mxu0 %v783
    %887 = vmatprep.subr.bf16.mxu0 0
    %888 = vmatpush1.bf16.msra.mxu0 %v784
    %889 = vmatprep.mubr.bf16.mxu0 %v553
    %890 = vmatmul.mubr.bf16.gmra.mrb[0].mxu0 %v552
    %v891 = vpop.f32.mrb[0].mxu0
    %v892 = vadd.f32 %v852, %v891
    %v893 = vpop.f32.mrb[0].mxu0
    %v894 = vpop.f32.mrb[0].mxu0
    %v895 = vpop.f32.mrb[0].mxu0
    %896 = vdwg.mxu0
    %897 = vst [vmem:[#allocation7] sm:$0xff] %v892
    // Predicated region
    $region30: #{_lambda_.1} parent=1 // pred_check
      _
    $region31: #{_lambda_.1} parent=1 // pred_check_branch
      %899 = sbr.rel (0) target = $region33
    $region32: #{_lambda_.1} parent=1 // pred_region
      %s901 = ssub.s32 128, 128
      %902 = vsyncadd [#allocation4], %s901
      %s904 = sshll.u32 [#allocation7], 4
      %s905 = int_to_ptr.vmem [resolvable:$true] %s904
      %907 = dma.vmem_to_hbm [thread:$0]  %s905, 128, %s5, [#allocation4]
    $region33: #{_lambda_.1} parent=1 // pred_fallthru
      _
    // Predicated region
    $region34: #{_lambda_.1} parent=1 // pred_check
      _
    $region35: #{_lambda_.1} parent=1 // pred_check_branch
      %909 = sbr.rel (0) target = $region37
    $region36: #{_lambda_.1} parent=1 // pred_region
      %910 = dma.done [#allocation4], 128
    $region37: #{_lambda_.1} parent=1 // pred_fallthru
      _
    %911 = vsyncpa [#allocation3], 1
    %912 = vsyncpa [#allocation6], 1
    %913 = vsyncpa [#allocation4], 1

</llo_original>
